<compile_context>
chip_gen: v5e
topology: v5e:2x2
jax: 0.10.0
libtpu: 0.0.40
codegen_flags: <defaults>
</compile_context>

<pallas_src>
import functools

import jax
import jax.numpy as jnp
from jax.experimental import pallas as pl
from jax.experimental.pallas import tpu as pltpu

LN_EPS = 1e-5


def _round_up(x, m):
    return ((x + m - 1) // m) * m


def _cdiv(a, b):
    return (a + b - 1) // b


# ------------------------------------------------------------------
# Kernel: one batch tile of ConditionalLayerNorm
# ------------------------------------------------------------------
def _cond_ln_kernel(x_ref, cond_ref, table_ref, o_ref, *, n_features: int, eps: float):
    x = x_ref[...].astype(jnp.float32)          # (TB, Fp)   Fp = padded features
    cond = cond_ref[...]                        # (TB, 1)    int32
    tb, fp = x.shape
    n_cond = table_ref.shape[0]

    # LayerNorm statistics. Padded feature columns are zero, so they contribute
    # 0 to both sums; divide by the true n_features (not Fp). Single pass, no
    # mask/iota temporaries.
    inv_f = 1.0 / float(n_features)
    sum_x = jnp.sum(x, axis=-1, keepdims=True)
    sum_x2 = jnp.sum(x * x, axis=-1, keepdims=True)
    mu = sum_x * inv_f
    var = jnp.maximum(sum_x2 * inv_f - mu * mu, 0.0)
    x_norm = (x - mu) * jax.lax.rsqrt(var + eps)

    # Per-row embedding gather for gamma AND beta with a single one-hot matmul:
    # (TB, C) @ (C, 2*Fp) on the MXU. One-hot is exact in the table's dtype.
    # NOTE: out-of-range condition indices yield an all-zero one-hot row (output
    # becomes 0) rather than raising like a PyTorch embedding lookup.
    cond_ids = jax.lax.broadcasted_iota(jnp.int32, (tb, n_cond), 1)
    one_hot = (cond_ids == cond).astype(table_ref.dtype)
    gb = jnp.dot(one_hot, table_ref[...], preferred_element_type=jnp.float32)
    gamma = gb[:, :fp]
    beta = gb[:, fp:]

    o_ref[...] = (gamma * x_norm + beta).astype(o_ref.dtype)


# ------------------------------------------------------------------
# Tile sizing
# ------------------------------------------------------------------
def _tile_budget_bytes():
    # Budget for the batch-tile buffers (x/out double-buffered + in-kernel f32
    # temporaries). Conservative fallback fits the v5e 16 MiB scoped default.
    try:
        cap = pltpu.get_tpu_info().vmem_capacity_bytes
        return int(min(cap // 4, 24 << 20))
    except Exception:
        return 12 << 20


def _choose_tb(B, Fp, x_itemsize, budget_bytes):
    # Per-row VMEM cost estimate: x + out double-buffered in their dtype plus
    # ~4 full-width f32 temporaries (x_f32, x_norm, gamma/beta, result).
    per_row = Fp * (4 * x_itemsize + 4 * 4)
    tb = (budget_bytes // per_row) // 8 * 8
    tb = max(8, tb)
    tb = min(tb, 2048)
    if B > 8:
        # Ensure >= 2 grid steps when the batch allows it, so the "parallel"
        # axis can shard across both v7x TensorCores (harmless on v5e/v6e).
        tb = min(tb, max(8, _round_up(_cdiv(B, 2), 8)))
    tb = min(tb, _round_up(B, 8))
    return tb, per_row


# ------------------------------------------------------------------
# Wrapper
# ------------------------------------------------------------------
def conditional_layer_norm(x, condition, gamma_table, beta_table, *, eps: float = LN_EPS):
    """x: (B, F) float; condition: (B,) or (B, 1) int; tables: (C, F)."""
    B, F = x.shape
    n_cond = gamma_table.shape[0]

    if condition.ndim == 2:
        condition = condition[:, 0]
    cond2d = condition.astype(jnp.int32).reshape(B, 1)

    # Lane-dense feature dim: pad to a multiple of 128 only when needed.
    Fp = _round_up(F, 128)
    if Fp != F:
        x = jnp.pad(x, ((0, 0), (0, Fp - F)))
        gamma_table = jnp.pad(gamma_table, ((0, 0), (0, Fp - F)))
        beta_table = jnp.pad(beta_table, ((0, 0), (0, Fp - F)))

    # One fused gather table: a single one-hot matmul fetches gamma and beta.
    gb_table = jnp.concatenate([gamma_table, beta_table], axis=-1)   # (C, 2*Fp)

    x_isz = x.dtype.itemsize
    tbl_isz = gb_table.dtype.itemsize

    TB, per_row = _choose_tb(B, Fp, x_isz, _tile_budget_bytes())
    grid = (pl.cdiv(B, TB),)   # ragged last block: reads unspecified, writes masked

    # Request a scoped-VMEM limit that covers the tile buffers, the resident
    # (double-buffered) table, and some headroom; stays well under v7x's 64 MiB.
    vmem_need = per_row * TB + 2 * n_cond * 2 * Fp * tbl_isz + (2 << 20)
    vmem_limit = int(min(max(vmem_need, 16 << 20), 48 << 20))

    out = pl.pallas_call(
        functools.partial(_cond_ln_kernel, n_features=F, eps=eps),
        out_shape=jax.ShapeDtypeStruct((B, Fp), x.dtype),
        grid=grid,
        in_specs=[
            pl.BlockSpec((TB, Fp), lambda i: (i, 0)),          # x tile
            pl.BlockSpec((TB, 1), lambda i: (i, 0)),           # condition tile
            pl.BlockSpec((n_cond, 2 * Fp), lambda i: (0, 0)),  # fused table (resident)
        ],
        out_specs=pl.BlockSpec((TB, Fp), lambda i: (i, 0)),
        compiler_params=pltpu.CompilerParams(
            dimension_semantics=("parallel",),
            vmem_limit_bytes=vmem_limit),
    )(x, cond2d, gb_table)

    return out if Fp == F else out[:, :F]


# ------------------------------------------------------------------
# Pure-JAX reference (matches nn.LayerNorm(elementwise_affine=False) + embeddings)
# ------------------------------------------------------------------
def conditional_layer_norm_ref(x, condition, gamma_table, beta_table, eps: float = LN_EPS):
    if condition.ndim == 2:
        condition = condition[:, 0]
    mu = jnp.mean(x, axis=-1, keepdims=True)
    var = jnp.mean((x - mu) ** 2, axis=-1, keepdims=True)
    x_norm = (x - mu) / jnp.sqrt(var + eps)
    gamma = gamma_table[condition]
    beta = beta_table[condition]
    return gamma * x_norm + beta


# ------------------------------------------------------------------
if __name__ == "__main__":
    batch, n_features, n_conditions = 16, 32, 4

    key = jax.random.PRNGKey(0)
    kx, kc, kg = jax.random.split(key, 3)

    x = jax.random.normal(kx, (batch, n_features), jnp.float32)
    condition = jax.random.randint(kc, (batch, 1), 0, n_conditions, jnp.int32)

    # Match PyTorch init: gamma ~ N(1.0, 0.02), beta = 0.
    gamma_table = 1.0 + 0.02 * jax.random.normal(
        kg, (n_conditions, n_features), jnp.float32)
    beta_table = jnp.zeros((n_conditions, n_features), jnp.float32)

    out = conditional_layer_norm(x, condition, gamma_table, beta_table)
    out = jax.block_until_ready(out)

    ref = conditional_layer_norm_ref(x, condition, gamma_table, beta_table)
    assert out.shape == (batch, n_features)
    assert jnp.allclose(out, ref, atol=2e-5, rtol=2e-5), "mismatch vs reference"

    print("KERNEL_OK")
</pallas_src>

<mosaic_0001>
module attributes {stable_mosaic.version = 11 : i64} {
  func.func @_cond_ln_kernel(%arg0: i32, %arg1: memref<8x128xf32, #tpu.memory_space<vmem>>, %arg2: memref<8x1xi32, #tpu.memory_space<vmem>>, %arg3: memref<4x256xf32, #tpu.memory_space<vmem>>, %arg4: memref<8x128xf32, #tpu.memory_space<vmem>>) attributes {dimension_semantics = [#tpu.dimension_semantics<parallel>], iteration_bounds = array<i64: 2>, scalar_prefetch = 0 : i64, scratch_operands = 0 : i64, tpu.core_type = #tpu.core_type<tc>, window_params = [{transform_indices = @transform_0, window_bounds = array<i64: 8, 128>}, {transform_indices = @transform_1, window_bounds = array<i64: 8, 1>}, {pipeline_mode = #tpu.pipeline_mode<synchronous>, transform_indices = @transform_2, window_bounds = array<i64: 4, 256>}, {transform_indices = @transform_3, window_bounds = array<i64: 8, 128>}]} {
    %c0 = arith.constant 0 : index
    %c0_0 = arith.constant 0 : index
    %0 = vector.load %arg1[%c0, %c0_0] : memref<8x128xf32, #tpu.memory_space<vmem>>, vector<8x128xf32>
    %c0_1 = arith.constant 0 : index
    %c0_2 = arith.constant 0 : index
    %1 = vector.load %arg2[%c0_1, %c0_2] : memref<8x1xi32, #tpu.memory_space<vmem>>, vector<8x1xi32>
    %cst = arith.constant dense<0.000000e+00> : vector<8xf32>
    %2 = vector.multi_reduction <add>, %0, %cst [1] : vector<8x128xf32> to vector<8xf32>
    %3 = vector.shape_cast %2 : vector<8xf32> to vector<8x1xf32>
    %4 = arith.mulf %0, %0 : vector<8x128xf32>
    %cst_3 = arith.constant dense<0.000000e+00> : vector<8xf32>
    %5 = vector.multi_reduction <add>, %4, %cst_3 [1] : vector<8x128xf32> to vector<8xf32>
    %6 = vector.shape_cast %5 : vector<8xf32> to vector<8x1xf32>
    %cst_4 = arith.constant 3.125000e-02 : f32
    %7 = vector.broadcast %cst_4 : f32 to vector<8x1xf32>
    %8 = arith.mulf %3, %7 : vector<8x1xf32>
    %cst_5 = arith.constant 3.125000e-02 : f32
    %9 = vector.broadcast %cst_5 : f32 to vector<8x1xf32>
    %10 = arith.mulf %6, %9 : vector<8x1xf32>
    %11 = arith.mulf %8, %8 : vector<8x1xf32>
    %12 = arith.subf %10, %11 : vector<8x1xf32>
    %cst_6 = arith.constant 0.000000e+00 : f32
    %13 = vector.broadcast %cst_6 : f32 to vector<8x1xf32>
    %14 = arith.maximumf %12, %13 : vector<8x1xf32>
    %15 = vector.broadcast %8 : vector<8x1xf32> to vector<8x128xf32>
    %16 = arith.subf %0, %15 : vector<8x128xf32>
    %cst_7 = arith.constant 9.99999974E-6 : f32
    %17 = vector.broadcast %cst_7 : f32 to vector<8x1xf32>
    %18 = arith.addf %14, %17 : vector<8x1xf32>
    %19 = math.rsqrt %18 : vector<8x1xf32>
    %20 = vector.broadcast %19 : vector<8x1xf32> to vector<8x128xf32>
    %21 = arith.mulf %16, %20 : vector<8x128xf32>
    %22 = tpu.iota {dimensions = array<i32: 1>} : vector<8x4xi32>
    %23 = vector.broadcast %1 : vector<8x1xi32> to vector<8x4xi32>
    %24 = arith.cmpi eq, %22, %23 : vector<8x4xi32>
    %25 = arith.extui %24 : vector<8x4xi1> to vector<8x4xi32>
    %26 = arith.sitofp %25 : vector<8x4xi32> to vector<8x4xf32>
    %c0_8 = arith.constant 0 : index
    %c0_9 = arith.constant 0 : index
    %27 = vector.load %arg3[%c0_8, %c0_9] : memref<4x256xf32, #tpu.memory_space<vmem>>, vector<4x256xf32>
    %cst_10 = arith.constant dense<0.000000e+00> : vector<8x256xf32>
    %28 = tpu.matmul %26, %27, %cst_10 {dimension_numbers = #tpu.dot_dimension_numbers<[1], [0], [0], [1], [0, 0, 1, 1], [], []>} : vector<8x4xf32>, vector<4x256xf32>, vector<8x256xf32> -> vector<8x256xf32>
    %29 = vector.extract_strided_slice %28 {offsets = [0, 0], sizes = [8, 128], strides = [1, 1]} : vector<8x256xf32> to vector<8x128xf32>
    %30 = vector.extract_strided_slice %28 {offsets = [0, 128], sizes = [8, 128], strides = [1, 1]} : vector<8x256xf32> to vector<8x128xf32>
    %31 = arith.mulf %29, %21 : vector<8x128xf32>
    %32 = arith.addf %31, %30 : vector<8x128xf32>
    %c0_11 = arith.constant 0 : index
    %c0_12 = arith.constant 0 : index
    %33 = vector.load %arg4[%c0_11, %c0_12] : memref<8x128xf32, #tpu.memory_space<vmem>>, vector<8x128xf32>
    tpu.vector_store %arg4[%c0_11, %c0_12], %32 {strides = array<i32>} : memref<8x128xf32, #tpu.memory_space<vmem>>, vector<8x128xf32>,
    return
  }
  func.func @transform_0(%arg0: i32) -> (i32, i32) {
    %c0_i32 = arith.constant 0 : i32
    %c0_i32_0 = arith.constant 0 : i32
    return %arg0, %c0_i32 : i32, i32
  }
  func.func @transform_1(%arg0: i32) -> (i32, i32) {
    %c0_i32 = arith.constant 0 : i32
    %c0_i32_0 = arith.constant 0 : i32
    return %arg0, %c0_i32 : i32, i32
  }
  func.func @transform_2(%arg0: i32) -> (i32, i32) {
    %c0_i32 = arith.constant 0 : i32
    %c0_i32_0 = arith.constant 0 : i32
    %c0_i32_1 = arith.constant 0 : i32
    return %c0_i32, %c0_i32_0 : i32, i32
  }
  func.func @transform_3(%arg0: i32) -> (i32, i32) {
    %c0_i32 = arith.constant 0 : i32
    %c0_i32_0 = arith.constant 0 : i32
    return %arg0, %c0_i32 : i32, i32
  }
}

</mosaic_0001>

<llo_original>
// kernel: tpu_custom_call.1
$region0: #{tpu_custom_call.1}
  #allocation0 [shape = 'u32[]', space=smem, size = 0x4, offset = 0x4, fixed_abs, tag = 'smem constant byte address 0x4 - core index']
  #allocation1 [shape = 'u32[72,128]{1,0:T(1,128)}', space=vmem, size = 0x9000, scoped, tag = 'internal scratch']
  %s0 = inlined_call_operand.vmem [shape: f32[16,128], index: 0, kind: input, shape index: {}]
  %s1 = inlined_call_operand.vmem [shape: s32[16,1], index: 1, kind: input, shape index: {}]
  %s2 = inlined_call_operand.hbm [shape: f32[4,256], index: 2, kind: input, shape index: {}]
  %s3 = inlined_call_operand.hbm [shape: f32[16,128], index: 3, kind: output, shape index: {}]
  %s4 = sld [smem:[#allocation0]]
  $region49: #{tpu_custom_call.1} parent=0
    _
  %s6 = ssub.s32 1, %s4
  %s7 = scalar_select 0, %s6, %s4
  $region1: #{tpu_custom_call.1} parent=0
    #allocation2 [shape = 'u8[4096]{0}', space=vmem, size = 0x1000, scoped, tag = 'input window, operand 2, single buffered']
    #allocation3 [shape = 's32[2]{0}', space=sflag, size = 0x8, scoped, tag = 'scoped memory for tpu_custom_call.1']
    #allocation4 [shape = 's32[2]{0}', space=sflag, size = 0x8, scoped, tag = 'scoped memory for tpu_custom_call.1']
    #allocation5 [shape = 'u8[8192]{0}', space=vmem, size = 0x2000, scoped, tag = 'output window, operand 0']
    %8 = vsyncpa [#allocation3], 0
    %9 = vsyncpa [#allocation4], 0
    %s10 = scalar_lea.sflag [#allocation4], 1
    %11 = vsyncpa %s10, 0
    loop: start=0, step=1, limit=4
    $region2: #{tpu_custom_call.1} parent=1 // loop_pre_header
      _
    $region3: #{tpu_custom_call.1} parent=1 // loop_header
      %s13 = sphi 0, %s17
      %p14 = scmp.ge.s32.totalorder %s13, 4
      %s23 = sphi 0, %s25
      %s26 = sphi 0, %s23
      %s27 = sphi 0, %s26
      %s43 = sphi 0, %s27
      %s49 = sphi 0, %s51
      %s52 = sphi 0, %s49
      %s53 = sphi 0, %s52
      %s69 = sphi 0, %s53
      %s73 = sphi 0, %s73
      %s75 = sphi 0, %s73
      %s76 = sphi 0, %s75
      %s90 = sphi 0, %s76
      %s96 = sphi 0, %s98
      %s99 = sphi 0, %s96
      %s100 = sphi 0, %s99
      %s116 = sphi 0, %s100
    $region4: #{tpu_custom_call.1} parent=1 // loop_header_branch
      %16 = sbr.rel (%p14) target = $region8
    $region5: #{tpu_custom_call.1} parent=1 // loop_body
      %s18 = ssub.s32 %s13, 1
      %s19 = ssub.s32 %s13, 2
      %s20 = sadd.s32 %s13, 1
      %s21 = ssub.s32 %s13, %s20
      %p22 = scmp.eq.s32.totalorder %s21, 0
      %s24 = sadd.s32 %s23, 1
      %s25 = scalar_select %p22, %s23, %s24
      %p28 = pneg %p22
      %p29 = scmp.eq.s32.totalorder %s13, 1
      %p30 = por %p28, %p29
      %p31 = scmp.ne.s32.totalorder %s23, %s26
      %p32 = scmp.eq.s32.totalorder %s13, 0
      %p33 = por %p31, %p32
      %p34 = scmp.ne.s32.totalorder %s23, %s26
      %p35 = scmp.eq.s32.totalorder %s18, 1
      %p36 = por %p34, %p35
      %p37 = scmp.ne.s32.totalorder %s26, %s27
      %p38 = scmp.eq.s32.totalorder %s18, 0
      %p39 = por %p37, %p38
      %p40 = scmp.ne.s32.totalorder %s26, %s27
      %p41 = scmp.eq.s32.totalorder %s19, 1
      %p42 = por %p40, %p41
      %p44 = scmp.ne.s32.totalorder %s27, %s43
      %p45 = scmp.eq.s32.totalorder %s19, 0
      %p46 = por %p44, %p45
      %s47 = ssub.s32 %s13, %s20
      %p48 = scmp.eq.s32.totalorder %s47, 0
      %s50 = sadd.s32 %s49, 1
      %s51 = scalar_select %p48, %s49, %s50
      %p54 = pneg %p48
      %p55 = scmp.eq.s32.totalorder %s13, 1
      %p56 = por %p54, %p55
      %p57 = scmp.ne.s32.totalorder %s49, %s52
      %p58 = scmp.eq.s32.totalorder %s13, 0
      %p59 = por %p57, %p58
      %p60 = scmp.ne.s32.totalorder %s49, %s52
      %p61 = scmp.eq.s32.totalorder %s18, 1
      %p62 = por %p60, %p61
      %p63 = scmp.ne.s32.totalorder %s52, %s53
      %p64 = scmp.eq.s32.totalorder %s18, 0
      %p65 = por %p63, %p64
      %p66 = scmp.ne.s32.totalorder %s52, %s53
      %p67 = scmp.eq.s32.totalorder %s19, 1
      %p68 = por %p66, %p67
      %p70 = scmp.ne.s32.totalorder %s53, %s69
      %p71 = scmp.eq.s32.totalorder %s19, 0
      %p72 = por %p70, %p71
      %s74 = sadd.s32 %s73, 1
      %p77 = scmp.eq.s32.totalorder %s13, 1
      %p78 = scmp.ne.s32.totalorder %s73, %s75
      %p79 = scmp.eq.s32.totalorder %s13, 0
      %p80 = por %p78, %p79
      %p81 = scmp.ne.s32.totalorder %s73, %s75
      %p82 = scmp.eq.s32.totalorder %s18, 1
      %p83 = por %p81, %p82
      %p84 = scmp.ne.s32.totalorder %s75, %s76
      %p85 = scmp.eq.s32.totalorder %s18, 0
      %p86 = por %p84, %p85
      %p87 = scmp.ne.s32.totalorder %s75, %s76
      %p88 = scmp.eq.s32.totalorder %s19, 1
      %p89 = por %p87, %p88
      %p91 = scmp.ne.s32.totalorder %s76, %s90
      %p92 = scmp.eq.s32.totalorder %s19, 0
      %p93 = por %p91, %p92
      %s94 = ssub.s32 %s13, %s20
      %p95 = scmp.eq.s32.totalorder %s94, 0
      %s97 = sadd.s32 %s96, 1
      %s98 = scalar_select %p95, %s96, %s97
      %p101 = pneg %p95
      %p102 = scmp.eq.s32.totalorder %s13, 1
      %p103 = por %p101, %p102
      %p104 = scmp.ne.s32.totalorder %s96, %s99
      %p105 = scmp.eq.s32.totalorder %s13, 0
      %p106 = por %p104, %p105
      %p107 = scmp.ne.s32.totalorder %s96, %s99
      %p108 = scmp.eq.s32.totalorder %s18, 1
      %p109 = por %p107, %p108
      %p110 = scmp.ne.s32.totalorder %s99, %s100
      %p111 = scmp.eq.s32.totalorder %s18, 0
      %p112 = por %p110, %p111
      %p113 = scmp.ne.s32.totalorder %s99, %s100
      %p114 = scmp.eq.s32.totalorder %s19, 1
      %p115 = por %p113, %p114
      %p117 = scmp.ne.s32.totalorder %s100, %s116
      %p118 = scmp.eq.s32.totalorder %s19, 0
      %p119 = por %p117, %p118
      %p120 = scmp.le.s32.totalorder 1, %s13
      %p121 = scmp.lt.s32.totalorder %s13, 3
      %p122 = pnand %p120, %p121
      %p123 = pneg %p122
      // Predicated region
      $region9: #{tpu_custom_call.1} parent=5 // pred_check
        _
      $region10: #{tpu_custom_call.1} parent=5 // pred_check_branch
        %125 = sbr.rel (%p122) target = $region12
      $region11: #{tpu_custom_call.1} parent=5 // pred_region
        %s126 = ssub.s32 %s13, 1
        // Predicated region
        $region13: #{tpu_custom_call.1} parent=11 // pred_check
          %p127 = pneg %p86
        $region14: #{tpu_custom_call.1} parent=11 // pred_check_branch
          %129 = sbr.rel (%p127) target = $region16
        $region15: #{tpu_custom_call.1} parent=11 // pred_region
          %131 = vsyncadd [#allocation3], 0
          %s133 = sshll.u32 %s2, 4
          %s134 = int_to_ptr.hbm [resolvable:$true] %s133
          %s135 = sshll.u32 [#allocation2], 4
          %s136 = int_to_ptr.vmem [resolvable:$true] %s135
          %138 = dma.hbm_to_vmem [thread:$0]  %s134, 128, %s136, [#allocation3]
        $region16: #{tpu_custom_call.1} parent=11 // pred_fallthru
          _
      $region12: #{tpu_custom_call.1} parent=5 // pred_fallthru
        _
      %p139 = scmp.lt.s32.totalorder %s13, 2
      // Predicated region
      $region17: #{tpu_custom_call.1} parent=5 // pred_check
        %p140 = pneg %p139
      $region18: #{tpu_custom_call.1} parent=5 // pred_check_branch
        %142 = sbr.rel (%p140) target = $region20
      $region19: #{tpu_custom_call.1} parent=5 // pred_region
        // Predicated region
        $region21: #{tpu_custom_call.1} parent=19 // pred_check
          %p143 = pneg %p33
        $region22: #{tpu_custom_call.1} parent=19 // pred_check_branch
          %145 = sbr.rel (%p143) target = $region24
        $region23: #{tpu_custom_call.1} parent=19 // pred_region
          %p146 = scmp.lt.s32.totalorder %s13, 1
          %s147 = scalar_select %p146, %s13, 1
          %s148 = smul.addr %s147, 8
          %s149 = scalar_lea.vmem %s0, %s148
        $region24: #{tpu_custom_call.1} parent=19 // pred_fallthru
          _
        // Predicated region
        $region25: #{tpu_custom_call.1} parent=19 // pred_check
          %p150 = pneg %p59
        $region26: #{tpu_custom_call.1} parent=19 // pred_check_branch
          %152 = sbr.rel (%p150) target = $region28
        $region27: #{tpu_custom_call.1} parent=19 // pred_region
          %p153 = scmp.lt.s32.totalorder %s13, 1
          %s154 = scalar_select %p153, %s13, 1
          %s155 = smul.addr %s154, 8
          %s156 = scalar_lea.vmem %s1, %s155
        $region28: #{tpu_custom_call.1} parent=19 // pred_fallthru
          _
      $region20: #{tpu_custom_call.1} parent=5 // pred_fallthru
        _
      %p157 = scmp.le.s32.totalorder 1, %s13
      %p158 = scmp.lt.s32.totalorder %s13, 3
      %p159 = pnand %p157, %p158
      %p160 = pneg %p159
      // Predicated region
      $region29: #{tpu_custom_call.1} parent=5 // pred_check
        _
      $region30: #{tpu_custom_call.1} parent=5 // pred_check_branch
        %162 = sbr.rel (%p159) target = $region32
      $region31: #{tpu_custom_call.1} parent=5 // pred_region
        %s163 = ssub.s32 %s13, 1
        // Predicated region
        $region33: #{tpu_custom_call.1} parent=31 // pred_check
          %p164 = pneg %p86
        $region34: #{tpu_custom_call.1} parent=31 // pred_check_branch
          %166 = sbr.rel (%p164) target = $region36
        $region35: #{tpu_custom_call.1} parent=31 // pred_region
          %168 = dma.done [#allocation3], 128
        $region36: #{tpu_custom_call.1} parent=31 // pred_fallthru
          _
        %p169 = scmp.lt.s32.totalorder %s18, 1
        %s170 = scalar_select %p169, %s18, 1
        %s171 = smul.addr %s170, 8
        %s172 = scalar_lea.vmem %s0, %s171
        %p173 = pneg %p39
        %p174 = pneg %p36
        %p175 = scmp.lt.s32.totalorder %s18, 1
        %s176 = scalar_select %p175, %s18, 1
        %s177 = smul.addr %s176, 8
        %s178 = scalar_lea.vmem %s1, %s177
        %p179 = pneg %p65
        %p180 = pneg %p62
        %p181 = pneg %p86
        %p182 = pneg %p83
        %p183 = pneg %p112
        %p184 = pneg %p109
        %s185 = sand.u32 %s99, 1
        %s186 = scalar_lea.sflag [#allocation4], %s185
        %s187 = sand.u32 %s99, 1
        %s188 = smul.addr %s187, 8
        %s189 = scalar_lea.vmem [#allocation5], %s188
        %p190 = scmp.lt.s32.totalorder %s18, 1
        %s191 = scalar_select %p190, %s18, 1
        %s192 = smul.addr %s191, 8
        %s193 = scalar_lea.vmem %s0, %s192
        %p194 = scmp.lt.s32.totalorder %s18, 1
        %s195 = scalar_select %p194, %s18, 1
        %s196 = smul.addr %s195, 8
        %s197 = scalar_lea.vmem %s1, %s196
        %v198 = vld [vmem:[%s193] sm:$0xff]
        %v199 = vld [vmem:[%s197] sm:$0xff]
        %200 = vadd.xlane.f32.xlu0 %v198
        %v201 = vpop.xlane.xlu0 %200
        %v202 = vmul.f32 %v198, %v198
        %203 = vadd.xlane.f32.xlu0 %v202
        %v204 = vpop.xlane.xlu0 %203
        %v205 = vmul.f32 %v201, 0.03125
        %v206 = vmul.f32 %v204, 0.03125
        %v207 = vmul.f32 %v205, %v205
        %v208 = vsub.f32 %v206, %v207
        %v209 = vmax.f32 %v208, 0.0
        %v210 = vsub.f32 %v198, %v205
        %v211 = vadd.f32 %v209, 1e-05
        %v212 = vrsqrt.pop %v211
        %v213 = vmul.f32 %v212, %v211
        %v214 = vmul.f32 %v213, %v212
        %v215 = vmul.f32 0.5, %v214
        %v216 = vsub.f32 1.5, %v215
        %v217 = vmul.f32 %v212, %v216
        %vm218 = vweird.f32 %v211
        %vm219 = vweird.f32 %v212
        %vm220 = vmor %vm218, %vm219
        %v221 = vsel %vm220, %v212, %v217
        %v222 = vmul.f32 %v210, %v221
        %v223 = vlaneseq
        %v224 = vand.u32 %v223, 127
        %225 = vset.pattern.permute.xlu0 0
        %226 = vperm.xlu0 %225, %v199
        %v227 = vpop.permute.xlu0 %226
        %vm228 = vcmp.eq.s32.totalorder %v224, %v227
        %v229 = vsel %vm228, 1, 0
        %v230 = vcvt.s32.f32 %v229
        %v231 = vld [vmem:[#allocation2] sm:$0xff]
        %233 = vst [vmem:[#allocation1] ss:$2 sm:$0xff] %v231
        %v234 = vld.sshfl [vmem:[#allocation1] sm:$0xff pattern:$0x75316420]
        %v235 = vld.sshfl [vmem:[#allocation1 + $0x8] sm:$0xff pattern:$0x75316420]
        %vm236 = vcmask 31744
        %v238 = vsel %vm236, %v230, 0
        %vm240 = vcmask 1043456
        %v241 = vsel %vm240, %v234, 0
        %v243 = vsel %vm240, %v235, 0
        %245 = vmatpush.msra.mxu0 0.0
        %246 = vmatpush.msra.mxu0 0.0
        %247 = vmatpush.msra.mxu0 0.0
        %248 = vmatpush.msra.mxu0 0.0
        %249 = vmatpush.msra.mxu0 0.0
        %250 = vmatpush.msra.mxu0 0.0
        %251 = vmatpush.msra.mxu0 0.0
        %252 = vmatpush.msra.mxu0 0.0
        %253 = vmatpush.msra.mxu0 0.0
        %254 = vmatpush.msra.mxu0 0.0
        %255 = vmatpush.msra.mxu0 0.0
        %256 = vmatpush.msra.mxu0 0.0
        %257 = vmatpush.msra.mxu0 0.0
        %258 = vmatpush.msra.mxu0 0.0
        %259 = vmatpush.msra.mxu0 0.0
        %260 = vmatpush.msra.mxu0 %v241
        %261 = vmatmul.f32.gmra.mxu0 %v238
        %v262 = vpop.f32.mrf.mxu0
        %v263 = vadd.f32 0.0, %v262
        %264 = vdwg.mxu0
        %265 = vmatpush.msra.mxu0 0.0
        %266 = vmatpush.msra.mxu0 0.0
        %267 = vmatpush.msra.mxu0 0.0
        %268 = vmatpush.msra.mxu0 0.0
        %269 = vmatpush.msra.mxu0 0.0
        %270 = vmatpush.msra.mxu0 0.0
        %271 = vmatpush.msra.mxu0 0.0
        %272 = vmatpush.msra.mxu0 0.0
        %273 = vmatpush.msra.mxu0 0.0
        %274 = vmatpush.msra.mxu0 0.0
        %275 = vmatpush.msra.mxu0 0.0
        %276 = vmatpush.msra.mxu0 0.0
        %277 = vmatpush.msra.mxu0 0.0
        %278 = vmatpush.msra.mxu0 0.0
        %279 = vmatpush.msra.mxu0 0.0
        %280 = vmatpush.msra.mxu0 %v243
        %281 = vmatmul.f32.gmra.mxu0 %v238
        %v282 = vpop.f32.mrf.mxu0
        %v283 = vadd.f32 0.0, %v282
        %284 = vdwg.mxu0
        %v285 = vmul.f32 %v263, %v222
        %v286 = vadd.f32 %v285, %v283
        %287 = vst [vmem:[%s189] sm:$0xff] %v286
        %s288 = sand.u32 %s99, 1
        %s289 = scalar_lea.sflag [#allocation4], %s288
        %s290 = sand.u32 %s99, 1
        %s291 = smul.addr %s290, 8
        %s292 = scalar_lea.vmem [#allocation5], %s291
        // Predicated region
        $region37: #{tpu_custom_call.1} parent=31 // pred_check
          %p293 = pneg %p109
        $region38: #{tpu_custom_call.1} parent=31 // pred_check_branch
          %295 = sbr.rel (%p293) target = $region40
        $region39: #{tpu_custom_call.1} parent=31 // pred_region
          %297 = vsyncadd %s289, 0
          %s298 = smul.addr %s18, 8
          %s299 = scalar_lea.hbm %s3, %s298
          %s301 = sshll.u32 %s292, 4
          %s302 = int_to_ptr.vmem [resolvable:$true] %s301
          %s303 = sshll.u32 %s299, 4
          %s304 = int_to_ptr.hbm [resolvable:$true] %s303
          %306 = dma.vmem_to_hbm [thread:$0]  %s302, 128, %s304, %s289
        $region40: #{tpu_custom_call.1} parent=31 // pred_fallthru
          _
      $region32: #{tpu_custom_call.1} parent=5 // pred_fallthru
        _
      %p307 = scmp.le.s32.totalorder 2, %s13
      // Predicated region
      $region41: #{tpu_custom_call.1} parent=5 // pred_check
        %p308 = pneg %p307
      $region42: #{tpu_custom_call.1} parent=5 // pred_check_branch
        %310 = sbr.rel (%p308) target = $region44
      $region43: #{tpu_custom_call.1} parent=5 // pred_region
        %s311 = ssub.s32 %s13, 2
        // Predicated region
        $region45: #{tpu_custom_call.1} parent=43 // pred_check
          %p312 = pneg %p115
        $region46: #{tpu_custom_call.1} parent=43 // pred_check_branch
          %314 = sbr.rel (%p312) target = $region48
        $region47: #{tpu_custom_call.1} parent=43 // pred_region
          %s315 = sand.u32 %s100, 1
          %s316 = scalar_lea.sflag [#allocation4], %s315
          %s317 = sand.u32 %s100, 1
          %s318 = smul.addr %s317, 8
          %s319 = scalar_lea.vmem [#allocation5], %s318
          %321 = dma.done %s316, 128
        $region48: #{tpu_custom_call.1} parent=43 // pred_fallthru
          _
      $region44: #{tpu_custom_call.1} parent=5 // pred_fallthru
        _
    $region6: #{tpu_custom_call.1} parent=1 // loop_footer
      %s17 = sadd.s32 1, %s13
    $region7: #{tpu_custom_call.1} parent=1 // loop_footer_branch
      %12 = sbr.rel target = $region3
    $region8: #{tpu_custom_call.1} parent=1 // loop_exit
      _
    %322 = vsyncpa [#allocation3], 1
    %s323 = scalar_lea.sflag [#allocation3], 1
    %324 = vsyncpa %s323, 1
    %325 = vsyncpa [#allocation4], 1
    %s326 = scalar_lea.sflag [#allocation4], 1
    %327 = vsyncpa %s326, 1

</llo_original>
